<compile_context>
chip_gen: v7x
topology: tpu7x:2x2x1
jax: 0.10.0
libtpu: 0.0.40
codegen_flags: <defaults>
</compile_context>

<pallas_src>
import math
import functools

import jax
import jax.numpy as jnp
from jax import lax
from jax.experimental import pallas as pl
from jax.experimental.pallas import tpu as pltpu


def _qkv_attn_kernel(q_ref, k_ref, v_ref, o_ref, *, scale_sq):
    # Block shapes are (1, HB, C, T); drop the leading (squeezable) batch dim.
    q = q_ref[0]  # (HB, C, T), input dtype (bf16 stays bf16 -> full-rate MXU)
    k = k_ref[0]  # (HB, C, T)
    v = v_ref[0]  # (HB, C, T)

    # scores[h, t, s] = sum_c q[h, c, t] * k[h, c, s]
    # dot_general contracts the channel axis directly (no .T relayout);
    # accumulate in f32 on the MXU.
    w = lax.dot_general(
        q, k,
        dimension_numbers=(((1,), (1,)), ((0,), (0,))),
        preferred_element_type=jnp.float32,
    )  # (HB, T, T) f32
    # One fused scale (== multiplying both q and k by 1/ch**0.25 as in torch).
    w = w * scale_sq

    # Softmax over the key axis, in f32 (matches torch's weight.float()).
    w = w - jnp.max(w, axis=-1, keepdims=True)
    e = jnp.exp(w)
    p = e * pl.reciprocal(jnp.sum(e, axis=-1, keepdims=True), approx=True)
    # torch casts the softmax weights back to the input dtype before the
    # second bmm; doing the same keeps the second matmul on the fast MXU path.
    p = p.astype(v.dtype)

    # a[h, c, t] = sum_s v[h, c, s] * p[h, t, s]   (again: no transpose)
    a = lax.dot_general(
        v, p,
        dimension_numbers=(((2,), (2,)), ((0,), (0,))),
        preferred_element_type=jnp.float32,
    )  # (HB, C, T) f32

    o_ref[0] = a.astype(o_ref.dtype)


def _vmem_limit_bytes():
    """Per-chip scoped VMEM limit: generous on v5e/v6e (128 MiB physical),
    conservative on v7x (64 MiB physical per TensorCore)."""
    default = 64 * 1024 * 1024
    try:
        cap = pltpu.get_tpu_info().vmem_capacity_bytes
        return max(32 * 1024 * 1024, min(default, (cap * 3) // 4))
    except Exception:  # no TPU info available (e.g. interpret mode)
        return default


def _choose_head_tile(bs, n_heads, ch, length, itemsize, budget_bytes):
    """Largest head-tile (divisor of n_heads) whose working set fits VMEM."""
    best = 1
    for hb in range(1, n_heads + 1):
        if n_heads % hb:
            continue
        # Keep at least 2 grid steps so v7x's two TensorCores both get work.
        if hb > 1 and bs * (n_heads // hb) < 2:
            continue
        # Double-buffered q/k/v tiles + double-buffered output tile.
        io_bytes = (3 * 2 + 2) * hb * ch * length * itemsize
        # f32 score block + input-dtype probability block (live at once).
        score_bytes = (4 + itemsize) * hb * length * length
        if io_bytes + score_bytes <= budget_bytes:
            best = hb
    return best


def qkv_attention(qkv, n_heads, *, head_tile=None):
    """Pallas implementation of QKVAttention.forward (mask=None).

    qkv: [N, 3*H*C, T]  ->  returns [N, H*C, T]
    """
    bs, width, length = qkv.shape
    assert width % (3 * n_heads) == 0
    ch = width // (3 * n_heads)
    scale = 1.0 / math.sqrt(math.sqrt(ch))
    scale_sq = scale * scale  # == 1/sqrt(ch)

    vmem_limit = _vmem_limit_bytes()
    if head_tile is None:
        head_tile = _choose_head_tile(
            bs, n_heads, ch, length, jnp.dtype(qkv.dtype).itemsize,
            budget_bytes=(vmem_limit * 7) // 10)  # headroom for compiler scratch
    assert n_heads % head_tile == 0
    n_htiles = n_heads // head_tile

    # Free, contiguous view: [N, 3*H, C, T].  Along axis 1 (in head-tile
    # blocks of size HB): q occupies blocks [0, n_htiles), k occupies
    # [n_htiles, 2*n_htiles), v occupies [2*n_htiles, 3*n_htiles) -- this is
    # exactly torch's qkv.chunk(3, dim=1) followed by the per-head view.
    qkv4 = qkv.reshape(bs, 3 * n_heads, ch, length)

    blk = (1, head_tile, ch, length)
    q_spec = pl.BlockSpec(blk, lambda n, h: (n, h, 0, 0))
    k_spec = pl.BlockSpec(blk, lambda n, h: (n, n_htiles + h, 0, 0))
    v_spec = pl.BlockSpec(blk, lambda n, h: (n, 2 * n_htiles + h, 0, 0))
    o_spec = pl.BlockSpec(blk, lambda n, h: (n, h, 0, 0))

    out = pl.pallas_call(
        functools.partial(_qkv_attn_kernel, scale_sq=scale_sq),
        out_shape=jax.ShapeDtypeStruct((bs, n_heads, ch, length), qkv.dtype),
        grid=(bs, n_htiles),
        in_specs=[q_spec, k_spec, v_spec],
        out_specs=o_spec,
        compiler_params=pltpu.CompilerParams(
            dimension_semantics=("parallel", "parallel"),
            vmem_limit_bytes=vmem_limit),
    )(qkv4, qkv4, qkv4)

    return out.reshape(bs, n_heads * ch, length)


def _reference_qkv_attention(qkv, n_heads):
    """Pure-JAX reference mirroring the PyTorch semantics."""
    bs, width, length = qkv.shape
    ch = width // (3 * n_heads)
    q, k, v = jnp.split(qkv, 3, axis=1)
    q = q.reshape(bs * n_heads, ch, length)
    k = k.reshape(bs * n_heads, ch, length)
    v = v.reshape(bs * n_heads, ch, length)
    scale = 1.0 / math.sqrt(math.sqrt(ch))
    w = jnp.einsum('bct,bcs->bts', q * scale, k * scale)
    w = jax.nn.softmax(w.astype(jnp.float32), axis=-1).astype(qkv.dtype)
    a = jnp.einsum('bts,bcs->bct', w, v)
    return a.reshape(bs, -1, length)


if __name__ == "__main__":
    # Small shapes consistent with the module: N=2, H=2, C=8, T=16
    n_heads = 2
    bs, ch, length = 2, 8, 16
    width = 3 * n_heads * ch  # 48

    key = jax.random.PRNGKey(0)
    qkv = jax.random.normal(key, (bs, width, length), dtype=jnp.float32)

    out = qkv_attention(qkv, n_heads)
    out = jax.block_until_ready(out)

    ref = _reference_qkv_attention(qkv, n_heads)
    assert out.shape == (bs, n_heads * ch, length)
    # Tolerance leaves headroom for the EUP approximate reciprocal used in
    # the softmax denominator (pl.reciprocal(..., approx=True)).
    max_err = float(jnp.max(jnp.abs(out - ref)))
    assert jnp.allclose(out, ref, atol=5e-3, rtol=5e-3), max_err

    print("KERNEL_OK")
</pallas_src>

<mosaic_0001>
module attributes {stable_mosaic.version = 11 : i64} {
  func.func @_qkv_attn_kernel(%arg0: i32, %arg1: i32, %arg2: memref<1x2x8x16xf32, #tpu.memory_space<vmem>>, %arg3: memref<1x2x8x16xf32, #tpu.memory_space<vmem>>, %arg4: memref<1x2x8x16xf32, #tpu.memory_space<vmem>>, %arg5: memref<1x2x8x16xf32, #tpu.memory_space<vmem>>) attributes {dimension_semantics = [#tpu.dimension_semantics<parallel>, #tpu.dimension_semantics<parallel>], iteration_bounds = array<i64: 2, 1>, scalar_prefetch = 0 : i64, scratch_operands = 0 : i64, tpu.core_type = #tpu.core_type<tc>, window_params = [{transform_indices = @transform_0, window_bounds = array<i64: 1, 2, 8, 16>}, {transform_indices = @transform_1, window_bounds = array<i64: 1, 2, 8, 16>}, {transform_indices = @transform_2, window_bounds = array<i64: 1, 2, 8, 16>}, {transform_indices = @transform_3, window_bounds = array<i64: 1, 2, 8, 16>}]} {
    %c0 = arith.constant 0 : index
    %c0_0 = arith.constant 0 : index
    %c0_1 = arith.constant 0 : index
    %c0_2 = arith.constant 0 : index
    %0 = vector.load %arg2[%c0, %c0_0, %c0_1, %c0_2] : memref<1x2x8x16xf32, #tpu.memory_space<vmem>>, vector<1x2x8x16xf32>
    %1 = vector.shape_cast %0 : vector<1x2x8x16xf32> to vector<2x8x16xf32>
    %c0_3 = arith.constant 0 : index
    %c0_4 = arith.constant 0 : index
    %c0_5 = arith.constant 0 : index
    %c0_6 = arith.constant 0 : index
    %2 = vector.load %arg3[%c0_3, %c0_4, %c0_5, %c0_6] : memref<1x2x8x16xf32, #tpu.memory_space<vmem>>, vector<1x2x8x16xf32>
    %3 = vector.shape_cast %2 : vector<1x2x8x16xf32> to vector<2x8x16xf32>
    %c0_7 = arith.constant 0 : index
    %c0_8 = arith.constant 0 : index
    %c0_9 = arith.constant 0 : index
    %c0_10 = arith.constant 0 : index
    %4 = vector.load %arg4[%c0_7, %c0_8, %c0_9, %c0_10] : memref<1x2x8x16xf32, #tpu.memory_space<vmem>>, vector<1x2x8x16xf32>
    %5 = vector.shape_cast %4 : vector<1x2x8x16xf32> to vector<2x8x16xf32>
    %cst = arith.constant dense<0.000000e+00> : vector<2x16x16xf32>
    %6 = tpu.matmul %1, %3, %cst {dimension_numbers = #tpu.dot_dimension_numbers<[1], [1], [2], [2], [0, 0, 0, 2, 1, 2], [0], [0]>} : vector<2x8x16xf32>, vector<2x8x16xf32>, vector<2x16x16xf32> -> vector<2x16x16xf32>
    %cst_11 = arith.constant 0.353553385 : f32
    %7 = vector.broadcast %cst_11 : f32 to vector<2x16x16xf32>
    %8 = arith.mulf %6, %7 : vector<2x16x16xf32>
    %cst_12 = arith.constant dense<0xFF800000> : vector<2x16xf32>
    %9 = vector.multi_reduction <maximumf>, %8, %cst_12 [2] : vector<2x16x16xf32> to vector<2x16xf32>
    %10 = vector.shape_cast %9 : vector<2x16xf32> to vector<2x16x1xf32>
    %11 = vector.broadcast %10 : vector<2x16x1xf32> to vector<2x16x16xf32>
    %12 = arith.subf %8, %11 : vector<2x16x16xf32>
    %13 = math.exp %12 : vector<2x16x16xf32>
    %cst_13 = arith.constant dense<0.000000e+00> : vector<2x16xf32>
    %14 = vector.multi_reduction <add>, %13, %cst_13 [2] : vector<2x16x16xf32> to vector<2x16xf32>
    %15 = vector.shape_cast %14 : vector<2x16xf32> to vector<2x16x1xf32>
    %16 = tpu.reciprocal %15 {approx = true} : vector<2x16x1xf32> -> vector<2x16x1xf32>
    %17 = vector.broadcast %16 : vector<2x16x1xf32> to vector<2x16x16xf32>
    %18 = arith.mulf %13, %17 : vector<2x16x16xf32>
    %cst_14 = arith.constant dense<0.000000e+00> : vector<2x8x16xf32>
    %19 = tpu.matmul %5, %18, %cst_14 {dimension_numbers = #tpu.dot_dimension_numbers<[2], [2], [1], [1], [0, 0, 0, 1, 1, 1], [0], [0]>} : vector<2x8x16xf32>, vector<2x16x16xf32>, vector<2x8x16xf32> -> vector<2x8x16xf32>
    %c0_15 = arith.constant 0 : index
    %c0_16 = arith.constant 0 : index
    %c0_17 = arith.constant 0 : index
    %c0_18 = arith.constant 0 : index
    %20 = vector.load %arg5[%c0_15, %c0_16, %c0_17, %c0_18] : memref<1x2x8x16xf32, #tpu.memory_space<vmem>>, vector<1x2x8x16xf32>
    %21 = vector.shape_cast %20 : vector<1x2x8x16xf32> to vector<2x8x16xf32>
    %22 = vector.shape_cast %19 : vector<2x8x16xf32> to vector<1x2x8x16xf32>
    tpu.vector_store %arg5[%c0_15, %c0_16, %c0_17, %c0_18], %22 {strides = array<i32>} : memref<1x2x8x16xf32, #tpu.memory_space<vmem>>, vector<1x2x8x16xf32>,
    return
  }
  func.func @transform_0(%arg0: i32, %arg1: i32) -> (i32, i32, i32, i32) {
    %c0_i32 = arith.constant 0 : i32
    %c0_i32_0 = arith.constant 0 : i32
    %c0_i32_1 = arith.constant 0 : i32
    return %arg0, %arg1, %c0_i32, %c0_i32_0 : i32, i32, i32, i32
  }
  func.func @transform_1(%arg0: i32, %arg1: i32) -> (i32, i32, i32, i32) {
    %c1_i32 = arith.constant 1 : i32
    %0 = arith.addi %c1_i32, %arg1 : i32
    %c0_i32 = arith.constant 0 : i32
    %c0_i32_0 = arith.constant 0 : i32
    %c0_i32_1 = arith.constant 0 : i32
    return %arg0, %0, %c0_i32, %c0_i32_0 : i32, i32, i32, i32
  }
  func.func @transform_2(%arg0: i32, %arg1: i32) -> (i32, i32, i32, i32) {
    %c2_i32 = arith.constant 2 : i32
    %0 = arith.addi %c2_i32, %arg1 : i32
    %c0_i32 = arith.constant 0 : i32
    %c0_i32_0 = arith.constant 0 : i32
    %c0_i32_1 = arith.constant 0 : i32
    return %arg0, %0, %c0_i32, %c0_i32_0 : i32, i32, i32, i32
  }
  func.func @transform_3(%arg0: i32, %arg1: i32) -> (i32, i32, i32, i32) {
    %c0_i32 = arith.constant 0 : i32
    %c0_i32_0 = arith.constant 0 : i32
    %c0_i32_1 = arith.constant 0 : i32
    return %arg0, %arg1, %c0_i32, %c0_i32_0 : i32, i32, i32, i32
  }
}

</mosaic_0001>

<llo_original>
// kernel: tpu_custom_call.1
$region0: #{tpu_custom_call.1}
  #allocation0 [shape = 'u32[]', space=smem, size = 0x4, offset = 0x4, fixed_abs, tag = 'smem constant byte address 0x4 - core index']
  #allocation1 [shape = 'u32[144,128]{1,0:T(1,128)}', space=vmem, size = 0x12000, scoped, tag = 'internal scratch']
  %s0 = inlined_call_operand.hbm [shape: f32[2,6,8,16], index: 0, kind: input, shape index: {}]
  %s1 = inlined_call_operand.hbm [shape: f32[2,6,8,16], index: 1, kind: input, shape index: {}]
  %s2 = inlined_call_operand.hbm [shape: f32[2,6,8,16], index: 2, kind: input, shape index: {}]
  %s3 = inlined_call_operand.hbm [shape: f32[2,2,8,16], index: 3, kind: output, shape index: {}]
  %s4 = sld [smem:[#allocation0]]
  $region57: #{tpu_custom_call.1} parent=0
    _
  %s6 = ssub.s32 1, %s4
  %s7 = scalar_select 0, %s6, %s4
  $region1: #{tpu_custom_call.1} parent=0
    #allocation2 [shape = 'u8[16384]{0}', space=vmem, size = 0x4000, scoped, tag = 'input window, operand 0']
    #allocation3 [shape = 's32[2]{0}', space=sflag, size = 0x8, scoped, tag = 'scoped memory for tpu_custom_call.1']
    #allocation4 [shape = 's32[2]{0}', space=sflag, size = 0x8, scoped, tag = 'scoped memory for tpu_custom_call.1']
    #allocation5 [shape = 'u8[16384]{0}', space=vmem, size = 0x4000, scoped, tag = 'input window, operand 1']
    #allocation6 [shape = 's32[2]{0}', space=sflag, size = 0x8, scoped, tag = 'scoped memory for tpu_custom_call.1']
    #allocation7 [shape = 'u8[16384]{0}', space=vmem, size = 0x4000, scoped, tag = 'input window, operand 2']
    #allocation8 [shape = 'u8[16384]{0}', space=vmem, size = 0x4000, scoped, tag = 'output window, operand 0']
    %8 = vsyncpa [#allocation3], 0
    %s9 = scalar_lea.sflag [#allocation3], 1
    %10 = vsyncpa %s9, 0
    %11 = vsyncpa [#allocation6], 0
    %s12 = scalar_lea.sflag [#allocation6], 1
    %13 = vsyncpa %s12, 0
    %14 = vsyncpa [#allocation4], 0
    %s15 = scalar_lea.sflag [#allocation4], 1
    %16 = vsyncpa %s15, 0
    loop: start=0, step=1, limit=4
    $region2: #{tpu_custom_call.1} parent=1 // loop_pre_header
      _
    $region3: #{tpu_custom_call.1} parent=1 // loop_header
      %s18 = sphi 0, %s22
      %p19 = scmp.ge.s32.totalorder %s18, 4
      %s25 = sphi 0, %s37
      %s26 = sphi 0, %s33
      %s27 = sphi 0, %s25
      %s28 = sphi 0, %s26
      %s29 = sphi 0, %s27
      %s30 = sphi 0, %s28
      %s42 = sphi 0, %s44
      %s45 = sphi 0, %s42
      %s46 = sphi 0, %s45
      %s62 = sphi 0, %s46
      %s72 = sphi 0, %s74
      %s75 = sphi 0, %s72
      %s76 = sphi 0, %s75
      %s92 = sphi 0, %s76
      %s102 = sphi 0, %s104
      %s105 = sphi 0, %s102
      %s106 = sphi 0, %s105
      %s122 = sphi 0, %s106
      %s130 = sphi 0, %s132
      %s133 = sphi 0, %s130
      %s134 = sphi 0, %s133
      %s150 = sphi 0, %s134
    $region4: #{tpu_custom_call.1} parent=1 // loop_header_branch
      %21 = sbr.rel (%p19) target = $region8
    $region5: #{tpu_custom_call.1} parent=1 // loop_body
      %s23 = ssub.s32 %s18, 1
      %s24 = ssub.s32 %s18, 2
      %s31 = sadd.s32 1, %s26
      %p32 = scmp.ge.s32.totalorder %s31, 1
      %s33 = scalar_select %p32, 0, %s31
      %s34 = sadd.s32 1, %s25
      %s35 = scalar_select %p32, %s34, %s25
      %p36 = scmp.ge.s32.totalorder %s35, 2
      %s37 = scalar_select %p36, 0, %s35
      %s38 = ssub.s32 %s25, %s37
      %s39 = ssub.s32 %s26, %s33
      %s40 = sor.u32 %s38, %s39
      %p41 = scmp.eq.s32.totalorder %s40, 0
      %s43 = sadd.s32 %s42, 1
      %s44 = scalar_select %p41, %s42, %s43
      %p47 = pneg %p41
      %p48 = scmp.eq.s32.totalorder %s18, 1
      %p49 = por %p47, %p48
      %p50 = scmp.ne.s32.totalorder %s42, %s45
      %p51 = scmp.eq.s32.totalorder %s18, 0
      %p52 = por %p50, %p51
      %p53 = scmp.ne.s32.totalorder %s42, %s45
      %p54 = scmp.eq.s32.totalorder %s23, 1
      %p55 = por %p53, %p54
      %p56 = scmp.ne.s32.totalorder %s45, %s46
      %p57 = scmp.eq.s32.totalorder %s23, 0
      %p58 = por %p56, %p57
      %p59 = scmp.ne.s32.totalorder %s45, %s46
      %p60 = scmp.eq.s32.totalorder %s24, 1
      %p61 = por %p59, %p60
      %p63 = scmp.ne.s32.totalorder %s46, %s62
      %p64 = scmp.eq.s32.totalorder %s24, 0
      %p65 = por %p63, %p64
      %s66 = sadd.s32 %s26, 1
      %s67 = sadd.s32 %s33, 1
      %s68 = ssub.s32 %s25, %s37
      %s69 = ssub.s32 %s66, %s67
      %s70 = sor.u32 %s68, %s69
      %p71 = scmp.eq.s32.totalorder %s70, 0
      %s73 = sadd.s32 %s72, 1
      %s74 = scalar_select %p71, %s72, %s73
      %p77 = pneg %p71
      %p78 = scmp.eq.s32.totalorder %s18, 1
      %p79 = por %p77, %p78
      %p80 = scmp.ne.s32.totalorder %s72, %s75
      %p81 = scmp.eq.s32.totalorder %s18, 0
      %p82 = por %p80, %p81
      %p83 = scmp.ne.s32.totalorder %s72, %s75
      %p84 = scmp.eq.s32.totalorder %s23, 1
      %p85 = por %p83, %p84
      %p86 = scmp.ne.s32.totalorder %s75, %s76
      %p87 = scmp.eq.s32.totalorder %s23, 0
      %p88 = por %p86, %p87
      %p89 = scmp.ne.s32.totalorder %s75, %s76
      %p90 = scmp.eq.s32.totalorder %s24, 1
      %p91 = por %p89, %p90
      %p93 = scmp.ne.s32.totalorder %s76, %s92
      %p94 = scmp.eq.s32.totalorder %s24, 0
      %p95 = por %p93, %p94
      %s96 = sadd.s32 %s26, 2
      %s97 = sadd.s32 %s33, 2
      %s98 = ssub.s32 %s25, %s37
      %s99 = ssub.s32 %s96, %s97
      %s100 = sor.u32 %s98, %s99
      %p101 = scmp.eq.s32.totalorder %s100, 0
      %s103 = sadd.s32 %s102, 1
      %s104 = scalar_select %p101, %s102, %s103
      %p107 = pneg %p101
      %p108 = scmp.eq.s32.totalorder %s18, 1
      %p109 = por %p107, %p108
      %p110 = scmp.ne.s32.totalorder %s102, %s105
      %p111 = scmp.eq.s32.totalorder %s18, 0
      %p112 = por %p110, %p111
      %p113 = scmp.ne.s32.totalorder %s102, %s105
      %p114 = scmp.eq.s32.totalorder %s23, 1
      %p115 = por %p113, %p114
      %p116 = scmp.ne.s32.totalorder %s105, %s106
      %p117 = scmp.eq.s32.totalorder %s23, 0
      %p118 = por %p116, %p117
      %p119 = scmp.ne.s32.totalorder %s105, %s106
      %p120 = scmp.eq.s32.totalorder %s24, 1
      %p121 = por %p119, %p120
      %p123 = scmp.ne.s32.totalorder %s106, %s122
      %p124 = scmp.eq.s32.totalorder %s24, 0
      %p125 = por %p123, %p124
      %s126 = ssub.s32 %s25, %s37
      %s127 = ssub.s32 %s26, %s33
      %s128 = sor.u32 %s126, %s127
      %p129 = scmp.eq.s32.totalorder %s128, 0
      %s131 = sadd.s32 %s130, 1
      %s132 = scalar_select %p129, %s130, %s131
      %p135 = pneg %p129
      %p136 = scmp.eq.s32.totalorder %s18, 1
      %p137 = por %p135, %p136
      %p138 = scmp.ne.s32.totalorder %s130, %s133
      %p139 = scmp.eq.s32.totalorder %s18, 0
      %p140 = por %p138, %p139
      %p141 = scmp.ne.s32.totalorder %s130, %s133
      %p142 = scmp.eq.s32.totalorder %s23, 1
      %p143 = por %p141, %p142
      %p144 = scmp.ne.s32.totalorder %s133, %s134
      %p145 = scmp.eq.s32.totalorder %s23, 0
      %p146 = por %p144, %p145
      %p147 = scmp.ne.s32.totalorder %s133, %s134
      %p148 = scmp.eq.s32.totalorder %s24, 1
      %p149 = por %p147, %p148
      %p151 = scmp.ne.s32.totalorder %s134, %s150
      %p152 = scmp.eq.s32.totalorder %s24, 0
      %p153 = por %p151, %p152
      %p154 = scmp.le.s32.totalorder 1, %s18
      %p155 = scmp.lt.s32.totalorder %s18, 3
      %p156 = pnand %p154, %p155
      %p157 = pneg %p156
      // Predicated region
      $region9: #{tpu_custom_call.1} parent=5 // pred_check
        _
      $region10: #{tpu_custom_call.1} parent=5 // pred_check_branch
        %159 = sbr.rel (%p156) target = $region12
      $region11: #{tpu_custom_call.1} parent=5 // pred_region
        %s160 = ssub.s32 %s18, 1
      $region12: #{tpu_custom_call.1} parent=5 // pred_fallthru
        _
      %p161 = scmp.lt.s32.totalorder %s18, 2
      // Predicated region
      $region13: #{tpu_custom_call.1} parent=5 // pred_check
        %p162 = pneg %p161
      $region14: #{tpu_custom_call.1} parent=5 // pred_check_branch
        %164 = sbr.rel (%p162) target = $region16
      $region15: #{tpu_custom_call.1} parent=5 // pred_region
        // Predicated region
        $region17: #{tpu_custom_call.1} parent=15 // pred_check
          %p165 = pneg %p52
        $region18: #{tpu_custom_call.1} parent=15 // pred_check_branch
          %167 = sbr.rel (%p165) target = $region20
        $region19: #{tpu_custom_call.1} parent=15 // pred_region
          %s168 = sand.u32 %s42, 1
          %s169 = scalar_lea.sflag [#allocation3], %s168
          %s170 = sand.u32 %s42, 1
          %s171 = smul.addr %s170, 16
          %s172 = scalar_lea.vmem [#allocation2], %s171
          %s173 = smul.u32 2, %s26
          %s175 = ssub.s32 256, 256
          %176 = vsyncadd %s169, %s175
          %s177 = smul.addr %s25, 6
          %s178 = sadd.s32 %s173, %s177
          %s179 = smul.addr %s178, 128
          %s180 = scalar_lea.hbm %s0, %s179
          %s181 = sshll.u32 %s172, 4
          %s182 = int_to_ptr.vmem [resolvable:$true] %s181
          %187 = dma.hbm_to_vmem [thread:$0]  %s180, 256, %s182, %s169, 128, 128, 8
        $region20: #{tpu_custom_call.1} parent=15 // pred_fallthru
          _
        // Predicated region
        $region21: #{tpu_custom_call.1} parent=15 // pred_check
          %p188 = pneg %p82
        $region22: #{tpu_custom_call.1} parent=15 // pred_check_branch
          %190 = sbr.rel (%p188) target = $region24
        $region23: #{tpu_custom_call.1} parent=15 // pred_region
          %s191 = sand.u32 %s18, 1
          %s192 = scalar_lea.sflag [#allocation6], %s191
          %s193 = sand.u32 %s72, 1
          %s194 = smul.addr %s193, 16
          %s195 = scalar_lea.vmem [#allocation5], %s194
          %s196 = sadd.s32 %s26, 1
          %s197 = smul.u32 2, %s196
          %s199 = ssub.s32 256, 256
          %200 = vsyncadd %s192, %s199
          %s201 = smul.addr %s25, 6
          %s202 = sadd.s32 %s197, %s201
          %s203 = smul.addr %s202, 128
          %s204 = scalar_lea.hbm %s1, %s203
          %s205 = sshll.u32 %s195, 4
          %s206 = int_to_ptr.vmem [resolvable:$true] %s205
          %211 = dma.hbm_to_vmem [thread:$0]  %s204, 256, %s206, %s192, 128, 128, 8
        $region24: #{tpu_custom_call.1} parent=15 // pred_fallthru
          _
        // Predicated region
        $region25: #{tpu_custom_call.1} parent=15 // pred_check
          %p212 = pneg %p112
        $region26: #{tpu_custom_call.1} parent=15 // pred_check_branch
          %214 = sbr.rel (%p212) target = $region28
        $region27: #{tpu_custom_call.1} parent=15 // pred_region
          %s215 = sand.u32 %s18, 1
          %s216 = scalar_lea.sflag [#allocation6], %s215
          %s217 = sand.u32 %s102, 1
          %s218 = smul.addr %s217, 16
          %s219 = scalar_lea.vmem [#allocation7], %s218
          %s220 = sadd.s32 %s26, 2
          %s221 = smul.u32 2, %s220
          %s223 = ssub.s32 256, 256
          %224 = vsyncadd %s216, %s223
          %s225 = smul.addr %s25, 6
          %s226 = sadd.s32 %s221, %s225
          %s227 = smul.addr %s226, 128
          %s228 = scalar_lea.hbm %s2, %s227
          %s229 = sshll.u32 %s219, 4
          %s230 = int_to_ptr.vmem [resolvable:$true] %s229
          %235 = dma.hbm_to_vmem [thread:$0]  %s228, 256, %s230, %s216, 128, 128, 8
        $region28: #{tpu_custom_call.1} parent=15 // pred_fallthru
          _
      $region16: #{tpu_custom_call.1} parent=5 // pred_fallthru
        _
      %p236 = scmp.le.s32.totalorder 1, %s18
      %p237 = scmp.lt.s32.totalorder %s18, 3
      %p238 = pnand %p236, %p237
      %p239 = pneg %p238
      // Predicated region
      $region29: #{tpu_custom_call.1} parent=5 // pred_check
        _
      $region30: #{tpu_custom_call.1} parent=5 // pred_check_branch
        %241 = sbr.rel (%p238) target = $region32
      $region31: #{tpu_custom_call.1} parent=5 // pred_region
        %s242 = ssub.s32 %s18, 1
        %s243 = sand.u32 %s45, 1
        %s244 = scalar_lea.sflag [#allocation3], %s243
        %s245 = sand.u32 %s45, 1
        %s246 = smul.addr %s245, 16
        %s247 = scalar_lea.vmem [#allocation2], %s246
        // Predicated region
        $region33: #{tpu_custom_call.1} parent=31 // pred_check
          %p248 = pneg %p58
        $region34: #{tpu_custom_call.1} parent=31 // pred_check_branch
          %250 = sbr.rel (%p248) target = $region36
        $region35: #{tpu_custom_call.1} parent=31 // pred_region
          %251 = dma.done %s244, 256
        $region36: #{tpu_custom_call.1} parent=31 // pred_fallthru
          _
        %s252 = sand.u32 %s23, 1
        %s253 = scalar_lea.sflag [#allocation6], %s252
        %s254 = sand.u32 %s75, 1
        %s255 = smul.addr %s254, 16
        %s256 = scalar_lea.vmem [#allocation5], %s255
        // Predicated region
        $region37: #{tpu_custom_call.1} parent=31 // pred_check
          %p257 = pneg %p88
        $region38: #{tpu_custom_call.1} parent=31 // pred_check_branch
          %259 = sbr.rel (%p257) target = $region40
        $region39: #{tpu_custom_call.1} parent=31 // pred_region
          %260 = dma.done %s253, 256
        $region40: #{tpu_custom_call.1} parent=31 // pred_fallthru
          _
        %s261 = sand.u32 %s23, 1
        %s262 = scalar_lea.sflag [#allocation6], %s261
        %s263 = sand.u32 %s105, 1
        %s264 = smul.addr %s263, 16
        %s265 = scalar_lea.vmem [#allocation7], %s264
        // Predicated region
        $region41: #{tpu_custom_call.1} parent=31 // pred_check
          %p266 = pneg %p118
        $region42: #{tpu_custom_call.1} parent=31 // pred_check_branch
          %268 = sbr.rel (%p266) target = $region44
        $region43: #{tpu_custom_call.1} parent=31 // pred_region
          %269 = dma.done %s262, 256
        $region44: #{tpu_custom_call.1} parent=31 // pred_fallthru
          _
        %s270 = sand.u32 %s45, 1
        %s271 = scalar_lea.sflag [#allocation3], %s270
        %s272 = sand.u32 %s45, 1
        %s273 = smul.addr %s272, 16
        %s274 = scalar_lea.vmem [#allocation2], %s273
        %p275 = pneg %p58
        %p276 = pneg %p55
        %s277 = sand.u32 %s23, 1
        %s278 = scalar_lea.sflag [#allocation6], %s277
        %s279 = sand.u32 %s75, 1
        %s280 = smul.addr %s279, 16
        %s281 = scalar_lea.vmem [#allocation5], %s280
        %p282 = pneg %p88
        %p283 = pneg %p85
        %s284 = sand.u32 %s23, 1
        %s285 = scalar_lea.sflag [#allocation6], %s284
        %s286 = sand.u32 %s105, 1
        %s287 = smul.addr %s286, 16
        %s288 = scalar_lea.vmem [#allocation7], %s287
        %p289 = pneg %p118
        %p290 = pneg %p115
        %p291 = pneg %p146
        %p292 = pneg %p143
        %s293 = sand.u32 %s133, 1
        %s294 = scalar_lea.sflag [#allocation4], %s293
        %s295 = sand.u32 %s133, 1
        %s296 = smul.addr %s295, 16
        %s297 = scalar_lea.vmem [#allocation8], %s296
        %s298 = smul.u32 2, %s28
        %s299 = sadd.s32 %s28, 1
        %s300 = smul.u32 2, %s299
        %s301 = sadd.s32 %s28, 2
        %s302 = smul.u32 2, %s301
        %s303 = smul.u32 2, %s28
        %v304 = vld [vmem:[%s247] sm:$0xff]
        %v305 = vld [vmem:[%s247 + $0x8] sm:$0xff]
        %v306 = vld [vmem:[%s256] sm:$0xff]
        %v307 = vld [vmem:[%s256 + $0x8] sm:$0xff]
        %v308 = vld [vmem:[%s265] sm:$0xff]
        %v309 = vld [vmem:[%s265 + $0x8] sm:$0xff]
        %310 = vxpose.xlu0.b32.start [1/16] %v304, 128
        %311 = vxpose.xlu0.b32.cont [2/16] 0.0, 128
        %312 = vxpose.xlu0.b32.cont [3/16] 0.0, 128
        %313 = vxpose.xlu0.b32.cont [4/16] 0.0, 128
        %314 = vxpose.xlu0.b32.cont [5/16] 0.0, 128
        %315 = vxpose.xlu0.b32.cont [6/16] 0.0, 128
        %316 = vxpose.xlu0.b32.cont [7/16] 0.0, 128
        %317 = vxpose.xlu0.b32.cont [8/16] 0.0, 128
        %318 = vxpose.xlu0.b32.cont [9/16] 0.0, 128
        %319 = vxpose.xlu0.b32.cont [10/16] 0.0, 128
        %320 = vxpose.xlu0.b32.cont [11/16] 0.0, 128
        %321 = vxpose.xlu0.b32.cont [12/16] 0.0, 128
        %322 = vxpose.xlu0.b32.cont [13/16] 0.0, 128
        %323 = vxpose.xlu0.b32.cont [14/16] 0.0, 128
        %324 = vxpose.xlu0.b32.cont [15/16] 0.0, 128
        %325 = vxpose.xlu0.b32.end [16/16] 0.0, 128
        %v326 = vpop.trf.xlu0
        %v327 = vpop.trf.xlu0
        %v328 = vpop.trf.xlu0
        %v329 = vpop.trf.xlu0
        %v330 = vpop.trf.xlu0
        %v331 = vpop.trf.xlu0
        %v332 = vpop.trf.xlu0
        %v333 = vpop.trf.xlu0
        %v334 = vpop.trf.xlu0
        %v335 = vpop.trf.xlu0
        %v336 = vpop.trf.xlu0
        %v337 = vpop.trf.xlu0
        %v338 = vpop.trf.xlu0
        %v339 = vpop.trf.xlu0
        %v340 = vpop.trf.xlu0
        %v341 = vpop.trf.xlu0
        %vm342 = vcmask 64512
        %v344 = vsel %vm342, %v326, 0
        %v347 = vsel %vm342, %v327, 0
        %349 = vmatprep.subr.mxu0 0.0
        %350 = vmatpush1.msra.mxu0 %v306
        %351 = vmatprep.subr.mxu0 0.0
        %352 = vmatpush1.msra.mxu0 0.0
        %353 = vmatprep.subr.mxu0 0.0
        %354 = vmatpush1.msra.mxu0 0.0
        %355 = vmatprep.subr.mxu0 0.0
        %356 = vmatpush1.msra.mxu0 0.0
        %357 = vmatprep.subr.mxu0 0.0
        %358 = vmatpush1.msra.mxu0 0.0
        %359 = vmatprep.subr.mxu0 0.0
        %360 = vmatpush1.msra.mxu0 0.0
        %361 = vmatprep.subr.mxu0 0.0
        %362 = vmatpush1.msra.mxu0 0.0
        %363 = vmatprep.subr.mxu0 0.0
        %364 = vmatpush1.msra.mxu0 0.0
        %365 = vmatprep.subr.mxu0 0.0
        %366 = vmatpush1.msra.mxu0 0.0
        %367 = vmatprep.subr.mxu0 0.0
        %368 = vmatpush1.msra.mxu0 0.0
        %369 = vmatprep.subr.mxu0 0.0
        %370 = vmatpush1.msra.mxu0 0.0
        %371 = vmatprep.subr.mxu0 0.0
        %372 = vmatpush1.msra.mxu0 0.0
        %373 = vmatprep.subr.mxu0 0.0
        %374 = vmatpush1.msra.mxu0 0.0
        %375 = vmatprep.subr.mxu0 0.0
        %376 = vmatpush1.msra.mxu0 0.0
        %377 = vmatprep.subr.mxu0 0.0
        %378 = vmatpush1.msra.mxu0 0.0
        %379 = vmatprep.subr.mxu0 0.0
        %380 = vmatpush1.msra.mxu0 0.0
        %381 = vmatprep.subr.mxu0 0.0
        %382 = vmatpush1.msra.mxu0 0.0
        %383 = vmatprep.subr.mxu0 0.0
        %384 = vmatpush1.msra.mxu0 0.0
        %385 = vmatprep.subr.mxu0 0.0
        %386 = vmatpush1.msra.mxu0 0.0
        %387 = vmatprep.subr.mxu0 0.0
        %388 = vmatpush1.msra.mxu0 0.0
        %389 = vmatprep.subr.mxu0 0.0
        %390 = vmatpush1.msra.mxu0 0.0
        %391 = vmatprep.subr.mxu0 0.0
        %392 = vmatpush1.msra.mxu0 0.0
        %393 = vmatprep.subr.mxu0 0.0
        %394 = vmatpush1.msra.mxu0 0.0
        %395 = vmatprep.subr.mxu0 0.0
        %396 = vmatpush1.msra.mxu0 0.0
        %397 = vmatprep.subr.mxu0 0.0
        %398 = vmatpush1.msra.mxu0 0.0
        %399 = vmatprep.subr.mxu0 0.0
        %400 = vmatpush1.msra.mxu0 0.0
        %401 = vmatprep.subr.mxu0 0.0
        %402 = vmatpush1.msra.mxu0 0.0
        %403 = vmatprep.subr.mxu0 0.0
        %404 = vmatpush1.msra.mxu0 0.0
        %405 = vmatprep.subr.mxu0 0.0
        %406 = vmatpush1.msra.mxu0 0.0
        %407 = vmatprep.subr.mxu0 0.0
        %408 = vmatpush1.msra.mxu0 0.0
        %409 = vmatprep.subr.mxu0 0.0
        %410 = vmatpush1.msra.mxu0 0.0
        %411 = vmatprep.subr.mxu0 0.0
        %412 = vmatpush1.msra.mxu0 0.0
        %413 = vmatprep.mubr.f32.mxu0 0.0
        %414 = vmatmul.mubr.f32.gmra.mrb[0].mxu0 %v344
        %v415 = vpop.f32.mrb[0].mxu0
        %v416 = vadd.f32 0.0, %v415
        %v417 = vpop.f32.mrb[0].mxu0
        %418 = vmatprep.mubr.f32.mxu0 0.0
        %419 = vmatmul.mubr.f32.gmra.mrb[0].mxu0 %v347
        %v420 = vpop.f32.mrb[0].mxu0
        %v421 = vadd.f32 0.0, %v420
        %v422 = vpop.f32.mrb[0].mxu0
        %423 = vdwg.mxu0
        %424 = vxpose.xlu0.b32.start [1/16] %v305, 128
        %425 = vxpose.xlu0.b32.cont [2/16] 0.0, 128
        %426 = vxpose.xlu0.b32.cont [3/16] 0.0, 128
        %427 = vxpose.xlu0.b32.cont [4/16] 0.0, 128
        %428 = vxpose.xlu0.b32.cont [5/16] 0.0, 128
        %429 = vxpose.xlu0.b32.cont [6/16] 0.0, 128
        %430 = vxpose.xlu0.b32.cont [7/16] 0.0, 128
        %431 = vxpose.xlu0.b32.cont [8/16] 0.0, 128
        %432 = vxpose.xlu0.b32.cont [9/16] 0.0, 128
        %433 = vxpose.xlu0.b32.cont [10/16] 0.0, 128
        %434 = vxpose.xlu0.b32.cont [11/16] 0.0, 128
        %435 = vxpose.xlu0.b32.cont [12/16] 0.0, 128
        %436 = vxpose.xlu0.b32.cont [13/16] 0.0, 128
        %437 = vxpose.xlu0.b32.cont [14/16] 0.0, 128
        %438 = vxpose.xlu0.b32.cont [15/16] 0.0, 128
        %439 = vxpose.xlu0.b32.end [16/16] 0.0, 128
        %v440 = vpop.trf.xlu0
        %v441 = vpop.trf.xlu0
        %v442 = vpop.trf.xlu0
        %v443 = vpop.trf.xlu0
        %v444 = vpop.trf.xlu0
        %v445 = vpop.trf.xlu0
        %v446 = vpop.trf.xlu0
        %v447 = vpop.trf.xlu0
        %v448 = vpop.trf.xlu0
        %v449 = vpop.trf.xlu0
        %v450 = vpop.trf.xlu0
        %v451 = vpop.trf.xlu0
        %v452 = vpop.trf.xlu0
        %v453 = vpop.trf.xlu0
        %v454 = vpop.trf.xlu0
        %v455 = vpop.trf.xlu0
        %v457 = vsel %vm342, %v440, 0
        %v460 = vsel %vm342, %v441, 0
        %462 = vmatprep.subr.mxu0 0.0
        %463 = vmatpush1.msra.mxu0 %v307
        %464 = vmatprep.subr.mxu0 0.0
        %465 = vmatpush1.msra.mxu0 0.0
        %466 = vmatprep.subr.mxu0 0.0
        %467 = vmatpush1.msra.mxu0 0.0
        %468 = vmatprep.subr.mxu0 0.0
        %469 = vmatpush1.msra.mxu0 0.0
        %470 = vmatprep.subr.mxu0 0.0
        %471 = vmatpush1.msra.mxu0 0.0
        %472 = vmatprep.subr.mxu0 0.0
        %473 = vmatpush1.msra.mxu0 0.0
        %474 = vmatprep.subr.mxu0 0.0
        %475 = vmatpush1.msra.mxu0 0.0
        %476 = vmatprep.subr.mxu0 0.0
        %477 = vmatpush1.msra.mxu0 0.0
        %478 = vmatprep.subr.mxu0 0.0
        %479 = vmatpush1.msra.mxu0 0.0
        %480 = vmatprep.subr.mxu0 0.0
        %481 = vmatpush1.msra.mxu0 0.0
        %482 = vmatprep.subr.mxu0 0.0
        %483 = vmatpush1.msra.mxu0 0.0
        %484 = vmatprep.subr.mxu0 0.0
        %485 = vmatpush1.msra.mxu0 0.0
        %486 = vmatprep.subr.mxu0 0.0
        %487 = vmatpush1.msra.mxu0 0.0
        %488 = vmatprep.subr.mxu0 0.0
        %489 = vmatpush1.msra.mxu0 0.0
        %490 = vmatprep.subr.mxu0 0.0
        %491 = vmatpush1.msra.mxu0 0.0
        %492 = vmatprep.subr.mxu0 0.0
        %493 = vmatpush1.msra.mxu0 0.0
        %494 = vmatprep.subr.mxu0 0.0
        %495 = vmatpush1.msra.mxu0 0.0
        %496 = vmatprep.subr.mxu0 0.0
        %497 = vmatpush1.msra.mxu0 0.0
        %498 = vmatprep.subr.mxu0 0.0
        %499 = vmatpush1.msra.mxu0 0.0
        %500 = vmatprep.subr.mxu0 0.0
        %501 = vmatpush1.msra.mxu0 0.0
        %502 = vmatprep.subr.mxu0 0.0
        %503 = vmatpush1.msra.mxu0 0.0
        %504 = vmatprep.subr.mxu0 0.0
        %505 = vmatpush1.msra.mxu0 0.0
        %506 = vmatprep.subr.mxu0 0.0
        %507 = vmatpush1.msra.mxu0 0.0
        %508 = vmatprep.subr.mxu0 0.0
        %509 = vmatpush1.msra.mxu0 0.0
        %510 = vmatprep.subr.mxu0 0.0
        %511 = vmatpush1.msra.mxu0 0.0
        %512 = vmatprep.subr.mxu0 0.0
        %513 = vmatpush1.msra.mxu0 0.0
        %514 = vmatprep.subr.mxu0 0.0
        %515 = vmatpush1.msra.mxu0 0.0
        %516 = vmatprep.subr.mxu0 0.0
        %517 = vmatpush1.msra.mxu0 0.0
        %518 = vmatprep.subr.mxu0 0.0
        %519 = vmatpush1.msra.mxu0 0.0
        %520 = vmatprep.subr.mxu0 0.0
        %521 = vmatpush1.msra.mxu0 0.0
        %522 = vmatprep.subr.mxu0 0.0
        %523 = vmatpush1.msra.mxu0 0.0
        %524 = vmatprep.subr.mxu0 0.0
        %525 = vmatpush1.msra.mxu0 0.0
        %526 = vmatprep.mubr.f32.mxu0 0.0
        %527 = vmatmul.mubr.f32.gmra.mrb[0].mxu0 %v457
        %v528 = vpop.f32.mrb[0].mxu0
        %v529 = vadd.f32 0.0, %v528
        %v530 = vpop.f32.mrb[0].mxu0
        %531 = vmatprep.mubr.f32.mxu0 0.0
        %532 = vmatmul.mubr.f32.gmra.mrb[0].mxu0 %v460
        %v533 = vpop.f32.mrb[0].mxu0
        %v534 = vadd.f32 0.0, %v533
        %v535 = vpop.f32.mrb[0].mxu0
        %536 = vdwg.mxu0
        %v537 = vmul.f32 %v416, 0.35355338
        %v538 = vmul.f32 %v421, 0.35355338
        %v539 = vmul.f32 %v529, 0.35355338
        %v540 = vmul.f32 %v534, 0.35355338
        %vm541 = vcmask 130048
        %v542 = vsel %vm541, %v537, -inf
        %543 = vmax.xlane.f32.xlu0 %v542
        %v544 = vpop.xlane.xlu0 %543
        %v545 = vsel %vm541, %v538, -inf
        %546 = vmax.xlane.f32.xlu0 %v545
        %v547 = vpop.xlane.xlu0 %546
        %v548 = vsel %vm541, %v539, -inf
        %549 = vmax.xlane.f32.xlu0 %v548
        %v550 = vpop.xlane.xlu0 %549
        %v551 = vsel %vm541, %v540, -inf
        %552 = vmax.xlane.f32.xlu0 %v551
        %v553 = vpop.xlane.xlu0 %552
        %v554 = vsub.f32 %v537, %v544
        %v555 = vsub.f32 %v538, %v547
        %v556 = vsub.f32 %v539, %v550
        %v557 = vsub.f32 %v540, %v553
        %v558 = vmul.f32 %v554, 1.442695
        %v559 = vpow.pop %v558
        %v560 = vmul.f32 %v555, 1.442695
        %v561 = vpow.pop %v560
        %v562 = vmul.f32 %v556, 1.442695
        %v563 = vpow.pop %v562
        %v564 = vmul.f32 %v557, 1.442695
        %v565 = vpow.pop %v564
        %v566 = vsel %vm541, %v559, 0.0
        %567 = vadd.xlane.f32.xlu0 %v566
        %v568 = vpop.xlane.xlu0 %567
        %v569 = vsel %vm541, %v561, 0.0
        %570 = vadd.xlane.f32.xlu0 %v569
        %v571 = vpop.xlane.xlu0 %570
        %v572 = vsel %vm541, %v563, 0.0
        %573 = vadd.xlane.f32.xlu0 %v572
        %v574 = vpop.xlane.xlu0 %573
        %v575 = vsel %vm541, %v565, 0.0
        %576 = vadd.xlane.f32.xlu0 %v575
        %v577 = vpop.xlane.xlu0 %576
        %v578 = vrcp.pop %v568
        %v579 = vrcp.pop %v571
        %v580 = vrcp.pop %v574
        %v581 = vrcp.pop %v577
        %v582 = vmul.f32 %v559, %v578
        %v583 = vmul.f32 %v561, %v579
        %v584 = vmul.f32 %v563, %v580
        %v585 = vmul.f32 %v565, %v581
        %v587 = vsel %vm541, %v308, 0
        %v590 = vsel %vm541, %v582, 0
        %v593 = vsel %vm541, %v583, 0
        %595 = vmatprep.subr.mxu0 0.0
        %596 = vmatpush1.xpose.msra.mxu0 %v590
        %597 = vmatprep.subr.mxu0 0.0
        %598 = vmatpush1.xpose.msra.mxu0 %v593
        %599 = vmatprep.subr.mxu0 0.0
        %600 = vmatpush1.xpose.msra.mxu0 0.0
        %601 = vmatprep.subr.mxu0 0.0
        %602 = vmatpush1.xpose.msra.mxu0 0.0
        %603 = vmatprep.subr.mxu0 0.0
        %604 = vmatpush1.xpose.msra.mxu0 0.0
        %605 = vmatprep.subr.mxu0 0.0
        %606 = vmatpush1.xpose.msra.mxu0 0.0
        %607 = vmatprep.subr.mxu0 0.0
        %608 = vmatpush1.xpose.msra.mxu0 0.0
        %609 = vmatprep.subr.mxu0 0.0
        %610 = vmatpush1.xpose.msra.mxu0 0.0
        %611 = vmatprep.subr.mxu0 0.0
        %612 = vmatpush1.xpose.msra.mxu0 0.0
        %613 = vmatprep.subr.mxu0 0.0
        %614 = vmatpush1.xpose.msra.mxu0 0.0
        %615 = vmatprep.subr.mxu0 0.0
        %616 = vmatpush1.xpose.msra.mxu0 0.0
        %617 = vmatprep.subr.mxu0 0.0
        %618 = vmatpush1.xpose.msra.mxu0 0.0
        %619 = vmatprep.subr.mxu0 0.0
        %620 = vmatpush1.xpose.msra.mxu0 0.0
        %621 = vmatprep.subr.mxu0 0.0
        %622 = vmatpush1.xpose.msra.mxu0 0.0
        %623 = vmatprep.subr.mxu0 0.0
        %624 = vmatpush1.xpose.msra.mxu0 0.0
        %625 = vmatprep.subr.mxu0 0.0
        %626 = vmatpush1.xpose.msra.mxu0 0.0
        %627 = vmatprep.subr.mxu0 0.0
        %628 = vmatpush1.xpose.msra.mxu0 0.0
        %629 = vmatprep.subr.mxu0 0.0
        %630 = vmatpush1.xpose.msra.mxu0 0.0
        %631 = vmatprep.subr.mxu0 0.0
        %632 = vmatpush1.xpose.msra.mxu0 0.0
        %633 = vmatprep.subr.mxu0 0.0
        %634 = vmatpush1.xpose.msra.mxu0 0.0
        %635 = vmatprep.subr.mxu0 0.0
        %636 = vmatpush1.xpose.msra.mxu0 0.0
        %637 = vmatprep.subr.mxu0 0.0
        %638 = vmatpush1.xpose.msra.mxu0 0.0
        %639 = vmatprep.subr.mxu0 0.0
        %640 = vmatpush1.xpose.msra.mxu0 0.0
        %641 = vmatprep.subr.mxu0 0.0
        %642 = vmatpush1.xpose.msra.mxu0 0.0
        %643 = vmatprep.subr.mxu0 0.0
        %644 = vmatpush1.xpose.msra.mxu0 0.0
        %645 = vmatprep.subr.mxu0 0.0
        %646 = vmatpush1.xpose.msra.mxu0 0.0
        %647 = vmatprep.subr.mxu0 0.0
        %648 = vmatpush1.xpose.msra.mxu0 0.0
        %649 = vmatprep.subr.mxu0 0.0
        %650 = vmatpush1.xpose.msra.mxu0 0.0
        %651 = vmatprep.subr.mxu0 0.0
        %652 = vmatpush1.xpose.msra.mxu0 0.0
        %653 = vmatprep.subr.mxu0 0.0
        %654 = vmatpush1.xpose.msra.mxu0 0.0
        %655 = vmatprep.subr.mxu0 0.0
        %656 = vmatpush1.xpose.msra.mxu0 0.0
        %657 = vmatprep.subr.mxu0 0.0
        %658 = vmatpush1.xpose.msra.mxu0 0.0
        %659 = vmatprep.mubr.f32.mxu0 0.0
        %660 = vmatmul.mubr.f32.gmra.mrb[0].mxu0 %v587
        %v661 = vpop.f32.mrb[0].mxu0
        %v662 = vadd.f32 0.0, %v661
        %v663 = vpop.f32.mrb[0].mxu0
        %664 = vdwg.mxu0
        %v666 = vsel %vm541, %v309, 0
        %v669 = vsel %vm541, %v584, 0
        %v672 = vsel %vm541, %v585, 0
        %674 = vmatprep.subr.mxu0 0.0
        %675 = vmatpush1.xpose.msra.mxu0 %v669
        %676 = vmatprep.subr.mxu0 0.0
        %677 = vmatpush1.xpose.msra.mxu0 %v672
        %678 = vmatprep.subr.mxu0 0.0
        %679 = vmatpush1.xpose.msra.mxu0 0.0
        %680 = vmatprep.subr.mxu0 0.0
        %681 = vmatpush1.xpose.msra.mxu0 0.0
        %682 = vmatprep.subr.mxu0 0.0
        %683 = vmatpush1.xpose.msra.mxu0 0.0
        %684 = vmatprep.subr.mxu0 0.0
        %685 = vmatpush1.xpose.msra.mxu0 0.0
        %686 = vmatprep.subr.mxu0 0.0
        %687 = vmatpush1.xpose.msra.mxu0 0.0
        %688 = vmatprep.subr.mxu0 0.0
        %689 = vmatpush1.xpose.msra.mxu0 0.0
        %690 = vmatprep.subr.mxu0 0.0
        %691 = vmatpush1.xpose.msra.mxu0 0.0
        %692 = vmatprep.subr.mxu0 0.0
        %693 = vmatpush1.xpose.msra.mxu0 0.0
        %694 = vmatprep.subr.mxu0 0.0
        %695 = vmatpush1.xpose.msra.mxu0 0.0
        %696 = vmatprep.subr.mxu0 0.0
        %697 = vmatpush1.xpose.msra.mxu0 0.0
        %698 = vmatprep.subr.mxu0 0.0
        %699 = vmatpush1.xpose.msra.mxu0 0.0
        %700 = vmatprep.subr.mxu0 0.0
        %701 = vmatpush1.xpose.msra.mxu0 0.0
        %702 = vmatprep.subr.mxu0 0.0
        %703 = vmatpush1.xpose.msra.mxu0 0.0
        %704 = vmatprep.subr.mxu0 0.0
        %705 = vmatpush1.xpose.msra.mxu0 0.0
        %706 = vmatprep.subr.mxu0 0.0
        %707 = vmatpush1.xpose.msra.mxu0 0.0
        %708 = vmatprep.subr.mxu0 0.0
        %709 = vmatpush1.xpose.msra.mxu0 0.0
        %710 = vmatprep.subr.mxu0 0.0
        %711 = vmatpush1.xpose.msra.mxu0 0.0
        %712 = vmatprep.subr.mxu0 0.0
        %713 = vmatpush1.xpose.msra.mxu0 0.0
        %714 = vmatprep.subr.mxu0 0.0
        %715 = vmatpush1.xpose.msra.mxu0 0.0
        %716 = vmatprep.subr.mxu0 0.0
        %717 = vmatpush1.xpose.msra.mxu0 0.0
        %718 = vmatprep.subr.mxu0 0.0
        %719 = vmatpush1.xpose.msra.mxu0 0.0
        %720 = vmatprep.subr.mxu0 0.0
        %721 = vmatpush1.xpose.msra.mxu0 0.0
        %722 = vmatprep.subr.mxu0 0.0
        %723 = vmatpush1.xpose.msra.mxu0 0.0
        %724 = vmatprep.subr.mxu0 0.0
        %725 = vmatpush1.xpose.msra.mxu0 0.0
        %726 = vmatprep.subr.mxu0 0.0
        %727 = vmatpush1.xpose.msra.mxu0 0.0
        %728 = vmatprep.subr.mxu0 0.0
        %729 = vmatpush1.xpose.msra.mxu0 0.0
        %730 = vmatprep.subr.mxu0 0.0
        %731 = vmatpush1.xpose.msra.mxu0 0.0
        %732 = vmatprep.subr.mxu0 0.0
        %733 = vmatpush1.xpose.msra.mxu0 0.0
        %734 = vmatprep.subr.mxu0 0.0
        %735 = vmatpush1.xpose.msra.mxu0 0.0
        %736 = vmatprep.subr.mxu0 0.0
        %737 = vmatpush1.xpose.msra.mxu0 0.0
        %738 = vmatprep.mubr.f32.mxu0 0.0
        %739 = vmatmul.mubr.f32.gmra.mrb[0].mxu0 %v666
        %v740 = vpop.f32.mrb[0].mxu0
        %v741 = vadd.f32 0.0, %v740
        %v742 = vpop.f32.mrb[0].mxu0
        %743 = vdwg.mxu0
        %744 = vst.msk [vmem:[%s297] sm:$0xff] %vm541, %v662
        %745 = vst.msk [vmem:[%s297 + $0x8] sm:$0xff] %vm541, %v741
        %s746 = sand.u32 %s133, 1
        %s747 = scalar_lea.sflag [#allocation4], %s746
        %s748 = sand.u32 %s133, 1
        %s749 = smul.addr %s748, 16
        %s750 = scalar_lea.vmem [#allocation8], %s749
        // Predicated region
        $region45: #{tpu_custom_call.1} parent=31 // pred_check
          %p751 = pneg %p143
        $region46: #{tpu_custom_call.1} parent=31 // pred_check_branch
          %753 = sbr.rel (%p751) target = $region48
        $region47: #{tpu_custom_call.1} parent=31 // pred_region
          %s754 = smul.u32 2, %s28
          %s756 = ssub.s32 256, 256
          %757 = vsyncadd %s747, %s756
          %s758 = smul.addr %s27, 2
          %s759 = sadd.s32 %s754, %s758
          %s760 = smul.addr %s759, 128
          %s761 = scalar_lea.hbm %s3, %s760
          %s762 = sshll.u32 %s750, 4
          %s763 = int_to_ptr.vmem [resolvable:$true] %s762
          %768 = dma.vmem_to_hbm [thread:$0]  %s763, 256, %s761, %s747, 128, 128, 8
        $region48: #{tpu_custom_call.1} parent=31 // pred_fallthru
          _
      $region32: #{tpu_custom_call.1} parent=5 // pred_fallthru
        _
      %p769 = scmp.le.s32.totalorder 2, %s18
      // Predicated region
      $region49: #{tpu_custom_call.1} parent=5 // pred_check
        %p770 = pneg %p769
      $region50: #{tpu_custom_call.1} parent=5 // pred_check_branch
        %772 = sbr.rel (%p770) target = $region52
      $region51: #{tpu_custom_call.1} parent=5 // pred_region
        %s773 = ssub.s32 %s18, 2
        // Predicated region
        $region53: #{tpu_custom_call.1} parent=51 // pred_check
          %p774 = pneg %p149
        $region54: #{tpu_custom_call.1} parent=51 // pred_check_branch
          %776 = sbr.rel (%p774) target = $region56
        $region55: #{tpu_custom_call.1} parent=51 // pred_region
          %s777 = sand.u32 %s134, 1
          %s778 = scalar_lea.sflag [#allocation4], %s777
          %s779 = sand.u32 %s134, 1
          %s780 = smul.addr %s779, 16
          %s781 = scalar_lea.vmem [#allocation8], %s780
          %782 = dma.done %s778, 256
        $region56: #{tpu_custom_call.1} parent=51 // pred_fallthru
          _
      $region52: #{tpu_custom_call.1} parent=5 // pred_fallthru
        _
    $region6: #{tpu_custom_call.1} parent=1 // loop_footer
      %s22 = sadd.s32 1, %s18
    $region7: #{tpu_custom_call.1} parent=1 // loop_footer_branch
      %17 = sbr.rel target = $region3
    $region8: #{tpu_custom_call.1} parent=1 // loop_exit
      _
    %783 = vsyncpa [#allocation3], 1
    %s784 = scalar_lea.sflag [#allocation3], 1
    %785 = vsyncpa %s784, 1
    %786 = vsyncpa [#allocation6], 1
    %s787 = scalar_lea.sflag [#allocation6], 1
    %788 = vsyncpa %s787, 1
    %789 = vsyncpa [#allocation4], 1
    %s790 = scalar_lea.sflag [#allocation4], 1
    %791 = vsyncpa %s790, 1

</llo_original>
